<compile_context>
chip_gen: v5e
topology: v5e:2x2
jax: 0.10.0
libtpu: 0.0.40
codegen_flags: <defaults>
</compile_context>

<pallas_src>
import math

import jax
import jax.numpy as jnp
from jax.experimental import pallas as pl
from jax.experimental.pallas import tpu as pltpu

MLP_SCALE = 4


def _gelu_tanh(x):
    # GELU with tanh approximation (matches torch.nn.GELU(approximate='tanh')).
    c = math.sqrt(2.0 / math.pi)
    return 0.5 * x * (1.0 + jnp.tanh(c * (x * (1.0 + 0.044715 * x * x))))


def _round_up(x, m):
    return ((x + m - 1) // m) * m


def _pad2d(x, rows, cols):
    r, c = x.shape
    if r == rows and c == cols:
        return x
    return jnp.pad(x, ((0, rows - r), (0, cols - c)))


def _vmem_budget_bytes():
    """~75% of per-core VMEM (v7x: ~48 MiB/TC, v5e/v6e: ~96 MiB)."""
    try:
        cap = int(pltpu.get_tpu_info().vmem_capacity_bytes)
    except Exception:
        cap = 64 * 1024 * 1024  # conservative (v7x per-core size)
    return int(0.75 * cap)


# ---------------------------------------------------------------------------
# Path A kernel: weights fully resident, grid over M only, no accumulator.
# ---------------------------------------------------------------------------
def _resident_kernel(x_ref, w1_ref, b1_ref, w2_ref, attn_ref, out_ref):
    # x_ref:    [bm, D]   program rows (matmul dtype)
    # w1_ref:   [D, H]    c_fc weight (resident: index_map constant)
    # b1_ref:   [1, H]    c_fc bias
    # w2_ref:   [H, D]    c_proj weight (resident), no bias
    # attn_ref: [bm, D]
    # out_ref:  [bm, D]
    h = jnp.dot(x_ref[...], w1_ref[...], preferred_element_type=jnp.float32)
    h = _gelu_tanh(h + b1_ref[...].astype(jnp.float32))  # f32 VPU/EUP path
    y = jnp.dot(h.astype(w2_ref.dtype), w2_ref[...],
                preferred_element_type=jnp.float32)
    out_ref[...] = (y * attn_ref[...].astype(jnp.float32)).astype(out_ref.dtype)


# ---------------------------------------------------------------------------
# Path B kernel (fallback for very large n_embd): hidden dim tiled, f32 acc.
# ---------------------------------------------------------------------------
def _htiled_kernel(x_ref, w1_ref, b1_ref, w2_ref, attn_ref, out_ref, acc_ref):
    k = pl.program_id(1)

    @pl.when(k == 0)
    def _init():
        acc_ref[...] = jnp.zeros_like(acc_ref)

    h = jnp.dot(x_ref[...], w1_ref[...], preferred_element_type=jnp.float32)
    h = _gelu_tanh(h + b1_ref[...].astype(jnp.float32))
    acc_ref[...] += jnp.dot(h.astype(w2_ref.dtype), w2_ref[...],
                            preferred_element_type=jnp.float32)

    @pl.when(k == pl.num_programs(1) - 1)
    def _finalize():
        out_ref[...] = (acc_ref[...] *
                        attn_ref[...].astype(jnp.float32)).astype(out_ref.dtype)


def mult_execute(program, attn, w1, b1, w2, *, matmul_dtype=None):
    """program, attn: [B, T, D].  w1: [D, 4D] (in,out), b1: [4D], w2: [4D, D].

    Returns MLP(program) * attn with shape [B, T, D] and program's dtype.
    matmul_dtype: optional cast for the MXU operands (e.g. jnp.bfloat16);
    accumulation stays f32 and the output dtype is unchanged.
    """
    B, T, D = program.shape
    H = w1.shape[1]
    assert attn.shape == (B, T, D)
    assert w1.shape == (D, H) and b1.shape == (H,) and w2.shape == (H, D)

    out_dtype = program.dtype
    M = B * T

    x2d = program.reshape(M, D)
    a2d = attn.reshape(M, D)
    b1_2d = b1.reshape(1, H)

    if matmul_dtype is not None:
        x2d = x2d.astype(matmul_dtype)
        w1 = w1.astype(matmul_dtype)
        w2 = w2.astype(matmul_dtype)

    in_bytes = jnp.dtype(x2d.dtype).itemsize
    attn_bytes = jnp.dtype(a2d.dtype).itemsize
    out_bytes = jnp.dtype(out_dtype).itemsize
    w_bytes = jnp.dtype(w1.dtype).itemsize

    # Lane-dense padding: last dims -> multiples of 128 (unmasked vst, full MXU
    # tiles); zero padding is exact for this computation.
    D_p = _round_up(D, 128)
    H_p = _round_up(H, 128)

    budget = _vmem_budget_bytes()

    def act_tile_bytes(bm, h_cols):
        return (2 * bm * D_p * in_bytes        # x tile, double-buffered
                + 2 * bm * D_p * attn_bytes    # attn tile, double-buffered
                + 2 * bm * D_p * out_bytes     # out tile, double-buffered
                + bm * h_cols * 4              # f32 hidden intermediate
                + bm * D_p * 4)                # f32 projection intermediate

    # -------------------------- Path A: resident weights -------------------
    resident_w = 2 * (D_p * H_p + H_p + H_p * D_p) * w_bytes  # 2 bufs (conserv.)
    block_m = None
    for bm in (1024, 512, 256, 128):           # MXU-aligned candidates only
        if resident_w + act_tile_bytes(bm, H_p) <= budget:
            block_m = bm
            break

    if block_m is not None:
        M_small = _round_up(M, 8)
        if M_small <= block_m:
            block_m = M_small                  # single tile == full (padded) M
            M_p = M_small
        else:
            M_p = _round_up(M, block_m)        # remainder handled by zero-pad

        x_p = _pad2d(x2d, M_p, D_p)
        a_p = _pad2d(a2d, M_p, D_p)
        w1_p = _pad2d(w1, D_p, H_p)
        b1_p = _pad2d(b1_2d, 1, H_p)
        w2_p = _pad2d(w2, H_p, D_p)

        cost = pl.CostEstimate(
            flops=4 * M * D * H,
            transcendentals=M * H,
            bytes_accessed=((2 * M * D) * in_bytes + M * D * out_bytes
                            + (D * H + H + H * D) * w_bytes),  # weights once
        )

        out2d = pl.pallas_call(
            _resident_kernel,
            out_shape=jax.ShapeDtypeStruct((M_p, D_p), out_dtype),
            grid_spec=pltpu.PrefetchScalarGridSpec(
                num_scalar_prefetch=0,
                grid=(M_p // block_m,),
                in_specs=[
                    pl.BlockSpec((block_m, D_p), lambda i: (i, 0)),  # program
                    pl.BlockSpec((D_p, H_p), lambda i: (0, 0)),      # W1 resident
                    pl.BlockSpec((1, H_p), lambda i: (0, 0)),        # b1 resident
                    pl.BlockSpec((H_p, D_p), lambda i: (0, 0)),      # W2 resident
                    pl.BlockSpec((block_m, D_p), lambda i: (i, 0)),  # attn
                ],
                out_specs=pl.BlockSpec((block_m, D_p), lambda i: (i, 0)),
            ),
            compiler_params=pltpu.CompilerParams(
                dimension_semantics=("parallel",),
                vmem_limit_bytes=budget,
            ),
            cost_estimate=cost,
        )(x_p, w1_p, b1_p, w2_p, a_p)
        return out2d[:M, :D].reshape(B, T, D)

    # ----------------- Path B: hidden dim tiled (very large D) -------------
    block_h = None
    block_m_t = None
    for bh in (512, 256):                       # multiples of 256 (v6e/v7x MXU)
        for bm in (1024, 512, 256, 128):
            tiled_w = 2 * (D_p * bh + bh + bh * D_p) * w_bytes
            if tiled_w + act_tile_bytes(bm, bh) + bm * D_p * 4 <= budget:
                block_h, block_m_t = bh, bm
                break
        if block_h is not None:
            break
    if block_h is None:
        block_m_t, block_h = 128, 256           # last resort

    H_pt = _round_up(H, block_h)
    M_small = _round_up(M, 8)
    if M_small <= block_m_t:
        block_m_t = M_small
        M_p = M_small
    else:
        M_p = _round_up(M, block_m_t)

    x_p = _pad2d(x2d, M_p, D_p)
    a_p = _pad2d(a2d, M_p, D_p)
    w1_p = _pad2d(w1, D_p, H_pt)
    b1_p = _pad2d(b1_2d, 1, H_pt)
    w2_p = _pad2d(w2, H_pt, D_p)

    num_m_tiles = M_p // block_m_t
    cost = pl.CostEstimate(
        flops=4 * M * D * H,
        transcendentals=M * H,
        bytes_accessed=((2 * M * D) * in_bytes + M * D * out_bytes
                        # weights are re-streamed once per M tile:
                        + num_m_tiles * (D * H + H + H * D) * w_bytes),
    )

    out2d = pl.pallas_call(
        _htiled_kernel,
        out_shape=jax.ShapeDtypeStruct((M_p, D_p), out_dtype),
        grid_spec=pltpu.PrefetchScalarGridSpec(
            num_scalar_prefetch=0,
            grid=(num_m_tiles, H_pt // block_h),
            in_specs=[
                pl.BlockSpec((block_m_t, D_p), lambda i, k: (i, 0)),  # program
                pl.BlockSpec((D_p, block_h), lambda i, k: (0, k)),    # W1 slice
                pl.BlockSpec((1, block_h), lambda i, k: (0, k)),      # b1 slice
                pl.BlockSpec((block_h, D_p), lambda i, k: (k, 0)),    # W2 slice
                pl.BlockSpec((block_m_t, D_p), lambda i, k: (i, 0)),  # attn
            ],
            out_specs=pl.BlockSpec((block_m_t, D_p), lambda i, k: (i, 0)),
            scratch_shapes=[pltpu.VMEM((block_m_t, D_p), jnp.float32)],
        ),
        compiler_params=pltpu.CompilerParams(
            dimension_semantics=("parallel", "arbitrary"),
            vmem_limit_bytes=budget,
        ),
        cost_estimate=cost,
    )(x_p, w1_p, b1_p, w2_p, a_p)
    return out2d[:M, :D].reshape(B, T, D)


def reference(program, attn, w1, b1, w2):
    h = program.astype(jnp.float32) @ w1.astype(jnp.float32) + b1.astype(jnp.float32)
    h = _gelu_tanh(h)
    return (h @ w2.astype(jnp.float32)) * attn.astype(jnp.float32)


if __name__ == "__main__":
    # Small config: batch=2, seq=8, n_embd=32 -> hidden = 128.
    B, T, D = 2, 8, 32
    H = MLP_SCALE * D

    key = jax.random.PRNGKey(0)
    k_prog, k_attn, k_w1, k_b1, k_w2 = jax.random.split(key, 5)

    program = jax.random.normal(k_prog, (B, T, D), dtype=jnp.float32)
    attn = jax.random.normal(k_attn, (B, T, D), dtype=jnp.float32)

    # Deterministic "nn.Linear"-style init (uniform in +/- 1/sqrt(fan_in)).
    w1 = jax.random.uniform(k_w1, (D, H), jnp.float32,
                            -1.0 / math.sqrt(D), 1.0 / math.sqrt(D))
    b1 = jax.random.uniform(k_b1, (H,), jnp.float32,
                            -1.0 / math.sqrt(D), 1.0 / math.sqrt(D))
    w2 = jax.random.uniform(k_w2, (H, D), jnp.float32,
                            -1.0 / math.sqrt(H), 1.0 / math.sqrt(H))

    ref = reference(program, attn, w1, b1, w2)

    # Native-dtype path (exact semantics of the module).
    out = jax.block_until_ready(mult_execute(program, attn, w1, b1, w2))
    assert out.shape == (B, T, D)
    assert out.dtype == program.dtype
    assert jnp.allclose(out, ref, atol=1e-5, rtol=1e-5), "mismatch vs reference"

    # MXU-friendly path: bf16 operands, f32 accumulation (looser tolerance).
    out_bf16 = jax.block_until_ready(
        mult_execute(program, attn, w1, b1, w2, matmul_dtype=jnp.bfloat16))
    assert out_bf16.shape == (B, T, D)
    assert out_bf16.dtype == program.dtype
    assert jnp.allclose(out_bf16, ref, atol=5e-2, rtol=5e-2), "bf16 path mismatch"

    print("KERNEL_OK")
</pallas_src>

<mosaic_0001>
module attributes {stable_mosaic.version = 11 : i64} {
  func.func @_resident_kernel(%arg0: i32, %arg1: memref<16x128xf32, #tpu.memory_space<vmem>>, %arg2: memref<128x128xf32, #tpu.memory_space<vmem>>, %arg3: memref<1x128xf32, #tpu.memory_space<vmem>>, %arg4: memref<128x128xf32, #tpu.memory_space<vmem>>, %arg5: memref<16x128xf32, #tpu.memory_space<vmem>>, %arg6: memref<16x128xf32, #tpu.memory_space<vmem>>) attributes {dimension_semantics = [#tpu.dimension_semantics<parallel>], iteration_bounds = array<i64: 1>, scalar_prefetch = 0 : i64, scratch_operands = 0 : i64, tpu.core_type = #tpu.core_type<tc>, window_params = [{transform_indices = @transform_0, window_bounds = array<i64: 16, 128>}, {pipeline_mode = #tpu.pipeline_mode<synchronous>, transform_indices = @transform_1, window_bounds = array<i64: 128, 128>}, {pipeline_mode = #tpu.pipeline_mode<synchronous>, transform_indices = @transform_2, window_bounds = array<i64: 1, 128>}, {pipeline_mode = #tpu.pipeline_mode<synchronous>, transform_indices = @transform_3, window_bounds = array<i64: 128, 128>}, {transform_indices = @transform_4, window_bounds = array<i64: 16, 128>}, {transform_indices = @transform_5, window_bounds = array<i64: 16, 128>}]} {
    %c0 = arith.constant 0 : index
    %c0_0 = arith.constant 0 : index
    %0 = vector.load %arg1[%c0, %c0_0] : memref<16x128xf32, #tpu.memory_space<vmem>>, vector<16x128xf32>
    %c0_1 = arith.constant 0 : index
    %c0_2 = arith.constant 0 : index
    %1 = vector.load %arg2[%c0_1, %c0_2] : memref<128x128xf32, #tpu.memory_space<vmem>>, vector<128x128xf32>
    %cst = arith.constant dense<0.000000e+00> : vector<16x128xf32>
    %2 = tpu.matmul %0, %1, %cst {dimension_numbers = #tpu.dot_dimension_numbers<[1], [0], [0], [1], [0, 0, 1, 1], [], []>} : vector<16x128xf32>, vector<128x128xf32>, vector<16x128xf32> -> vector<16x128xf32>
    %c0_3 = arith.constant 0 : index
    %c0_4 = arith.constant 0 : index
    %3 = vector.load %arg3[%c0_3, %c0_4] : memref<1x128xf32, #tpu.memory_space<vmem>>, vector<1x128xf32>
    %4 = vector.broadcast %3 : vector<1x128xf32> to vector<16x128xf32>
    %5 = arith.addf %2, %4 : vector<16x128xf32>
    %cst_5 = arith.constant 5.000000e-01 : f32
    %6 = vector.broadcast %cst_5 : f32 to vector<16x128xf32>
    %7 = arith.mulf %6, %5 : vector<16x128xf32>
    %cst_6 = arith.constant 4.471500e-02 : f32
    %8 = vector.broadcast %cst_6 : f32 to vector<16x128xf32>
    %9 = arith.mulf %8, %5 : vector<16x128xf32>
    %10 = arith.mulf %9, %5 : vector<16x128xf32>
    %cst_7 = arith.constant 1.000000e+00 : f32
    %11 = vector.broadcast %cst_7 : f32 to vector<16x128xf32>
    %12 = arith.addf %11, %10 : vector<16x128xf32>
    %13 = arith.mulf %5, %12 : vector<16x128xf32>
    %cst_8 = arith.constant 0.797884583 : f32
    %14 = vector.broadcast %cst_8 : f32 to vector<16x128xf32>
    %15 = arith.mulf %14, %13 : vector<16x128xf32>
    %16 = math.tanh %15 : vector<16x128xf32>
    %cst_9 = arith.constant 1.000000e+00 : f32
    %17 = vector.broadcast %cst_9 : f32 to vector<16x128xf32>
    %18 = arith.addf %17, %16 : vector<16x128xf32>
    %19 = arith.mulf %7, %18 : vector<16x128xf32>
    %c0_10 = arith.constant 0 : index
    %c0_11 = arith.constant 0 : index
    %20 = vector.load %arg4[%c0_10, %c0_11] : memref<128x128xf32, #tpu.memory_space<vmem>>, vector<128x128xf32>
    %cst_12 = arith.constant dense<0.000000e+00> : vector<16x128xf32>
    %21 = tpu.matmul %19, %20, %cst_12 {dimension_numbers = #tpu.dot_dimension_numbers<[1], [0], [0], [1], [0, 0, 1, 1], [], []>} : vector<16x128xf32>, vector<128x128xf32>, vector<16x128xf32> -> vector<16x128xf32>
    %c0_13 = arith.constant 0 : index
    %c0_14 = arith.constant 0 : index
    %22 = vector.load %arg5[%c0_13, %c0_14] : memref<16x128xf32, #tpu.memory_space<vmem>>, vector<16x128xf32>
    %23 = arith.mulf %21, %22 : vector<16x128xf32>
    %c0_15 = arith.constant 0 : index
    %c0_16 = arith.constant 0 : index
    %24 = vector.load %arg6[%c0_15, %c0_16] : memref<16x128xf32, #tpu.memory_space<vmem>>, vector<16x128xf32>
    tpu.vector_store %arg6[%c0_15, %c0_16], %23 {strides = array<i32>} : memref<16x128xf32, #tpu.memory_space<vmem>>, vector<16x128xf32>,
    return
  }
  func.func @transform_0(%arg0: i32) -> (i32, i32) {
    %c0_i32 = arith.constant 0 : i32
    %c0_i32_0 = arith.constant 0 : i32
    return %arg0, %c0_i32 : i32, i32
  }
  func.func @transform_1(%arg0: i32) -> (i32, i32) {
    %c0_i32 = arith.constant 0 : i32
    %c0_i32_0 = arith.constant 0 : i32
    %c0_i32_1 = arith.constant 0 : i32
    return %c0_i32, %c0_i32_0 : i32, i32
  }
  func.func @transform_2(%arg0: i32) -> (i32, i32) {
    %c0_i32 = arith.constant 0 : i32
    %c0_i32_0 = arith.constant 0 : i32
    %c0_i32_1 = arith.constant 0 : i32
    return %c0_i32, %c0_i32_0 : i32, i32
  }
  func.func @transform_3(%arg0: i32) -> (i32, i32) {
    %c0_i32 = arith.constant 0 : i32
    %c0_i32_0 = arith.constant 0 : i32
    %c0_i32_1 = arith.constant 0 : i32
    return %c0_i32, %c0_i32_0 : i32, i32
  }
  func.func @transform_4(%arg0: i32) -> (i32, i32) {
    %c0_i32 = arith.constant 0 : i32
    %c0_i32_0 = arith.constant 0 : i32
    return %arg0, %c0_i32 : i32, i32
  }
  func.func @transform_5(%arg0: i32) -> (i32, i32) {
    %c0_i32 = arith.constant 0 : i32
    %c0_i32_0 = arith.constant 0 : i32
    return %arg0, %c0_i32 : i32, i32
  }
}

</mosaic_0001>

<llo_original>
// kernel: tpu_custom_call.1
$region0: #{tpu_custom_call.1}
  #allocation0 [shape = 'u32[]', space=smem, size = 0x4, offset = 0x4, fixed_abs, tag = 'smem constant byte address 0x4 - core index']
  #allocation1 [shape = 'u32[72,128]{1,0:T(1,128)}', space=vmem, size = 0x9000, scoped, tag = 'internal scratch']
  %s0 = inlined_call_operand.hbm [shape: f32[16,128], index: 0, kind: input, shape index: {}]
  %s1 = inlined_call_operand.hbm [shape: f32[128,128], index: 1, kind: input, shape index: {}]
  %s2 = inlined_call_operand.vmem [shape: f32[1,128], index: 2, kind: input, shape index: {}]
  %s3 = inlined_call_operand.hbm [shape: f32[128,128], index: 3, kind: input, shape index: {}]
  %s4 = inlined_call_operand.hbm [shape: f32[16,128], index: 4, kind: input, shape index: {}]
  %s5 = inlined_call_operand.hbm [shape: f32[16,128], index: 5, kind: output, shape index: {}]
  %s6 = sld [smem:[#allocation0]]
  $region46: #{tpu_custom_call.1} parent=0
    _
  %s8 = ssub.s32 1, %s6
  %s9 = scalar_select 0, %s8, %s6
  $region1: #{tpu_custom_call.1} parent=0
    #allocation2 [shape = 'u8[8192]{0}', space=vmem, size = 0x2000, scoped, tag = 'input window, operand 0, single buffered']
    #allocation3 [shape = 's32[1]{0}', space=sflag, size = 0x4, scoped, tag = 'scoped memory for tpu_custom_call.1']
    #allocation4 [shape = 's32[1]{0}', space=sflag, size = 0x4, scoped, tag = 'scoped memory for tpu_custom_call.1']
    #allocation5 [shape = 'u8[65536]{0}', space=vmem, size = 0x10000, scoped, tag = 'input window, operand 1, single buffered']
    #allocation6 [shape = 's32[1]{0}', space=sflag, size = 0x4, scoped, tag = 'scoped memory for tpu_custom_call.1']
    #allocation7 [shape = 'u8[65536]{0}', space=vmem, size = 0x10000, scoped, tag = 'input window, operand 3, single buffered']
    #allocation8 [shape = 'u8[8192]{0}', space=vmem, size = 0x2000, scoped, tag = 'input window, operand 4, single buffered']
    #allocation9 [shape = 's32[1]{0}', space=sflag, size = 0x4, scoped, tag = 'scoped memory for tpu_custom_call.1']
    #allocation10 [shape = 'u8[8192]{0}', space=vmem, size = 0x2000, scoped, tag = 'output window, operand 0, single buffered']
    %10 = vsyncpa [#allocation3], 0
    %11 = vsyncpa [#allocation6], 0
    %12 = vsyncpa [#allocation9], 0
    %13 = vsyncpa [#allocation4], 0
    // Predicated region
    $region2: #{tpu_custom_call.1} parent=1 // pred_check
      _
    $region3: #{tpu_custom_call.1} parent=1 // pred_check_branch
      %15 = sbr.rel (0) target = $region5
    $region4: #{tpu_custom_call.1} parent=1 // pred_region
      %17 = vsyncadd [#allocation3], 0
      %s18 = sshll.u32 %s0, 4
      %s19 = int_to_ptr.hbm [resolvable:$true] %s18
      %s20 = sshll.u32 [#allocation2], 4
      %s21 = int_to_ptr.vmem [resolvable:$true] %s20
      %26 = dma.hbm_to_vmem [thread:$0]  %s19, 256, %s21, [#allocation3], 128, 128, 8
    $region5: #{tpu_custom_call.1} parent=1 // pred_fallthru
      _
    // Predicated region
    $region6: #{tpu_custom_call.1} parent=1 // pred_check
      _
    $region7: #{tpu_custom_call.1} parent=1 // pred_check_branch
      %28 = sbr.rel (0) target = $region9
    $region8: #{tpu_custom_call.1} parent=1 // pred_region
      %30 = vsyncadd [#allocation6], 0
      %s31 = sshll.u32 %s1, 4
      %s32 = int_to_ptr.hbm [resolvable:$true] %s31
      %s33 = sshll.u32 [#allocation5], 4
      %s34 = int_to_ptr.vmem [resolvable:$true] %s33
      %39 = dma.hbm_to_vmem [thread:$0]  %s32, 2048, %s34, [#allocation6], 128, 128, 8
    $region9: #{tpu_custom_call.1} parent=1 // pred_fallthru
      _
    // Predicated region
    $region10: #{tpu_custom_call.1} parent=1 // pred_check
      _
    $region11: #{tpu_custom_call.1} parent=1 // pred_check_branch
      %41 = sbr.rel (0) target = $region13
    $region12: #{tpu_custom_call.1} parent=1 // pred_region
      _
    $region13: #{tpu_custom_call.1} parent=1 // pred_fallthru
      _
    // Predicated region
    $region14: #{tpu_custom_call.1} parent=1 // pred_check
      _
    $region15: #{tpu_custom_call.1} parent=1 // pred_check_branch
      %43 = sbr.rel (0) target = $region17
    $region16: #{tpu_custom_call.1} parent=1 // pred_region
      %45 = vsyncadd [#allocation6], 0
      %s46 = sshll.u32 %s3, 4
      %s47 = int_to_ptr.hbm [resolvable:$true] %s46
      %s48 = sshll.u32 [#allocation7], 4
      %s49 = int_to_ptr.vmem [resolvable:$true] %s48
      %54 = dma.hbm_to_vmem [thread:$0]  %s47, 2048, %s49, [#allocation6], 128, 128, 8
    $region17: #{tpu_custom_call.1} parent=1 // pred_fallthru
      _
    // Predicated region
    $region18: #{tpu_custom_call.1} parent=1 // pred_check
      _
    $region19: #{tpu_custom_call.1} parent=1 // pred_check_branch
      %56 = sbr.rel (0) target = $region21
    $region20: #{tpu_custom_call.1} parent=1 // pred_region
      %58 = vsyncadd [#allocation9], 0
      %s59 = sshll.u32 %s4, 4
      %s60 = int_to_ptr.hbm [resolvable:$true] %s59
      %s61 = sshll.u32 [#allocation8], 4
      %s62 = int_to_ptr.vmem [resolvable:$true] %s61
      %67 = dma.hbm_to_vmem [thread:$0]  %s60, 256, %s62, [#allocation9], 128, 128, 8
    $region21: #{tpu_custom_call.1} parent=1 // pred_fallthru
      _
    // Predicated region
    $region22: #{tpu_custom_call.1} parent=1 // pred_check
      _
    $region23: #{tpu_custom_call.1} parent=1 // pred_check_branch
      %69 = sbr.rel (0) target = $region25
    $region24: #{tpu_custom_call.1} parent=1 // pred_region
      %71 = dma.done [#allocation3], 256
    $region25: #{tpu_custom_call.1} parent=1 // pred_fallthru
      _
    // Predicated region
    $region26: #{tpu_custom_call.1} parent=1 // pred_check
      _
    $region27: #{tpu_custom_call.1} parent=1 // pred_check_branch
      %73 = sbr.rel (0) target = $region29
    $region28: #{tpu_custom_call.1} parent=1 // pred_region
      %75 = dma.done [#allocation6], 2048
    $region29: #{tpu_custom_call.1} parent=1 // pred_fallthru
      _
    // Predicated region
    $region30: #{tpu_custom_call.1} parent=1 // pred_check
      _
    $region31: #{tpu_custom_call.1} parent=1 // pred_check_branch
      %77 = sbr.rel (0) target = $region33
    $region32: #{tpu_custom_call.1} parent=1 // pred_region
      %79 = dma.done [#allocation6], 2048
    $region33: #{tpu_custom_call.1} parent=1 // pred_fallthru
      _
    // Predicated region
    $region34: #{tpu_custom_call.1} parent=1 // pred_check
      _
    $region35: #{tpu_custom_call.1} parent=1 // pred_check_branch
      %81 = sbr.rel (0) target = $region37
    $region36: #{tpu_custom_call.1} parent=1 // pred_region
      %83 = dma.done [#allocation9], 256
    $region37: #{tpu_custom_call.1} parent=1 // pred_fallthru
      _
    %v84 = vld [vmem:[#allocation2] sm:$0xff]
    %v85 = vld [vmem:[#allocation2 + $0x8] sm:$0xff]
    %v86 = vld [vmem:[#allocation5] sm:$0xff]
    %v87 = vld [vmem:[#allocation5 + $0x8] sm:$0xff]
    %v88 = vld [vmem:[#allocation5 + $0x10] sm:$0xff]
    %v89 = vld [vmem:[#allocation5 + $0x18] sm:$0xff]
    %v90 = vld [vmem:[#allocation5 + $0x20] sm:$0xff]
    %v91 = vld [vmem:[#allocation5 + $0x28] sm:$0xff]
    %v92 = vld [vmem:[#allocation5 + $0x30] sm:$0xff]
    %v93 = vld [vmem:[#allocation5 + $0x38] sm:$0xff]
    %v94 = vld [vmem:[#allocation5 + $0x40] sm:$0xff]
    %v95 = vld [vmem:[#allocation5 + $0x48] sm:$0xff]
    %v96 = vld [vmem:[#allocation5 + $0x50] sm:$0xff]
    %v97 = vld [vmem:[#allocation5 + $0x58] sm:$0xff]
    %v98 = vld [vmem:[#allocation5 + $0x60] sm:$0xff]
    %v99 = vld [vmem:[#allocation5 + $0x68] sm:$0xff]
    %v100 = vld [vmem:[#allocation5 + $0x70] sm:$0xff]
    %v101 = vld [vmem:[#allocation5 + $0x78] sm:$0xff]
    %v102 = vld [vmem:[%s2] sm:$0x1]
    %v104 = vperm.slane %v102, 0
    %106 = vmatpush.msra.mxu0 %v101
    %107 = vmatpush.msra.mxu0 %v100
    %108 = vmatpush.msra.mxu0 %v99
    %109 = vmatpush.msra.mxu0 %v98
    %110 = vmatpush.msra.mxu0 %v97
    %111 = vmatpush.msra.mxu0 %v96
    %112 = vmatpush.msra.mxu0 %v95
    %113 = vmatpush.msra.mxu0 %v94
    %114 = vmatpush.msra.mxu0 %v93
    %115 = vmatpush.msra.mxu0 %v92
    %116 = vmatpush.msra.mxu0 %v91
    %117 = vmatpush.msra.mxu0 %v90
    %118 = vmatpush.msra.mxu0 %v89
    %119 = vmatpush.msra.mxu0 %v88
    %120 = vmatpush.msra.mxu0 %v87
    %121 = vmatpush.msra.mxu0 %v86
    %122 = vmatmul.f32.gmra.mxu0 %v84
    %v123 = vpop.f32.mrf.mxu0
    %v124 = vadd.f32 %v104, %v123
    %125 = vmatmul.f32.gmra.mxu0 %v85
    %v126 = vpop.f32.mrf.mxu0
    %v127 = vadd.f32 %v104, %v126
    %128 = vdwg.mxu0
    %v129 = vmul.f32 %v124, 0.5
    %v130 = vmul.f32 %v127, 0.5
    %v131 = vmul.f32 %v124, 0.044715
    %v132 = vmul.f32 %v127, 0.044715
    %v133 = vmul.f32 %v131, %v124
    %v134 = vmul.f32 %v132, %v127
    %v135 = vadd.f32 %v133, 1.0
    %v136 = vadd.f32 %v134, 1.0
    %v137 = vmul.f32 %v124, %v135
    %v138 = vmul.f32 %v127, %v136
    %v139 = vmul.f32 %v137, 0.7978846
    %v140 = vmul.f32 %v138, 0.7978846
    %v141 = vtanh.pop %v139
    %v142 = vtanh.pop %v140
    %v143 = vadd.f32 %v141, 1.0
    %v144 = vadd.f32 %v142, 1.0
    %v145 = vmul.f32 %v129, %v143
    %v146 = vmul.f32 %v130, %v144
    %v147 = vld [vmem:[#allocation7] sm:$0xff]
    %v148 = vld [vmem:[#allocation7 + $0x8] sm:$0xff]
    %v149 = vld [vmem:[#allocation7 + $0x10] sm:$0xff]
    %v150 = vld [vmem:[#allocation7 + $0x18] sm:$0xff]
    %v151 = vld [vmem:[#allocation7 + $0x20] sm:$0xff]
    %v152 = vld [vmem:[#allocation7 + $0x28] sm:$0xff]
    %v153 = vld [vmem:[#allocation7 + $0x30] sm:$0xff]
    %v154 = vld [vmem:[#allocation7 + $0x38] sm:$0xff]
    %v155 = vld [vmem:[#allocation7 + $0x40] sm:$0xff]
    %v156 = vld [vmem:[#allocation7 + $0x48] sm:$0xff]
    %v157 = vld [vmem:[#allocation7 + $0x50] sm:$0xff]
    %v158 = vld [vmem:[#allocation7 + $0x58] sm:$0xff]
    %v159 = vld [vmem:[#allocation7 + $0x60] sm:$0xff]
    %v160 = vld [vmem:[#allocation7 + $0x68] sm:$0xff]
    %v161 = vld [vmem:[#allocation7 + $0x70] sm:$0xff]
    %v162 = vld [vmem:[#allocation7 + $0x78] sm:$0xff]
    %163 = vmatpush.msra.mxu0 %v162
    %164 = vmatpush.msra.mxu0 %v161
    %165 = vmatpush.msra.mxu0 %v160
    %166 = vmatpush.msra.mxu0 %v159
    %167 = vmatpush.msra.mxu0 %v158
    %168 = vmatpush.msra.mxu0 %v157
    %169 = vmatpush.msra.mxu0 %v156
    %170 = vmatpush.msra.mxu0 %v155
    %171 = vmatpush.msra.mxu0 %v154
    %172 = vmatpush.msra.mxu0 %v153
    %173 = vmatpush.msra.mxu0 %v152
    %174 = vmatpush.msra.mxu0 %v151
    %175 = vmatpush.msra.mxu0 %v150
    %176 = vmatpush.msra.mxu0 %v149
    %177 = vmatpush.msra.mxu0 %v148
    %178 = vmatpush.msra.mxu0 %v147
    %179 = vmatmul.f32.gmra.mxu0 %v145
    %v180 = vpop.f32.mrf.mxu0
    %v181 = vadd.f32 0.0, %v180
    %182 = vmatmul.f32.gmra.mxu0 %v146
    %v183 = vpop.f32.mrf.mxu0
    %v184 = vadd.f32 0.0, %v183
    %185 = vdwg.mxu0
    %v186 = vld [vmem:[#allocation8] sm:$0xff]
    %v187 = vld [vmem:[#allocation8 + $0x8] sm:$0xff]
    %v188 = vmul.f32 %v181, %v186
    %v189 = vmul.f32 %v184, %v187
    %190 = vst [vmem:[#allocation10] sm:$0xff] %v188
    %191 = vst [vmem:[#allocation10 + $0x8] sm:$0xff] %v189
    // Predicated region
    $region38: #{tpu_custom_call.1} parent=1 // pred_check
      _
    $region39: #{tpu_custom_call.1} parent=1 // pred_check_branch
      %193 = sbr.rel (0) target = $region41
    $region40: #{tpu_custom_call.1} parent=1 // pred_region
      %195 = vsyncadd [#allocation4], 0
      %s196 = sshll.u32 [#allocation10], 4
      %s197 = int_to_ptr.vmem [resolvable:$true] %s196
      %s198 = sshll.u32 %s5, 4
      %s199 = int_to_ptr.hbm [resolvable:$true] %s198
      %204 = dma.vmem_to_hbm [thread:$0]  %s197, 256, %s199, [#allocation4], 128, 128, 8
    $region41: #{tpu_custom_call.1} parent=1 // pred_fallthru
      _
    // Predicated region
    $region42: #{tpu_custom_call.1} parent=1 // pred_check
      _
    $region43: #{tpu_custom_call.1} parent=1 // pred_check_branch
      %206 = sbr.rel (0) target = $region45
    $region44: #{tpu_custom_call.1} parent=1 // pred_region
      %208 = dma.done [#allocation4], 256
    $region45: #{tpu_custom_call.1} parent=1 // pred_fallthru
      _
    %209 = vsyncpa [#allocation3], 1
    %210 = vsyncpa [#allocation6], 1
    %211 = vsyncpa [#allocation9], 1
    %212 = vsyncpa [#allocation4], 1

</llo_original>
